<compile_context>
chip_gen: v5e
topology: v5e:2x2
jax: 0.10.0
libtpu: 0.0.40
codegen_flags: <defaults>
</compile_context>

<pallas_src>
import functools
import math

import jax
import jax.numpy as jnp
from jax.experimental import pallas as pl
from jax.experimental.pallas import tpu as pltpu


def _rope_cache_kernel(coef_ref, cos_ref, sin_ref, *, pos_per_row, duplicate_halves):
    """Compute one (rows, W_out) slab of the cos/sin caches.

    coef_ref : (2, Wc) f32 VMEM
        row 0: per-lane inverse-frequency scale
        row 1: per-lane integer position offset within a folded row (0 if unfolded)
    cos_ref / sin_ref : (rows, W_out) in output dtype
        W_out == Wc            when duplicate_halves is False
        W_out == 2 * Wc        when duplicate_halves is True (cat((freqs, freqs)))
    """
    rows = cos_ref.shape[0]
    wc = coef_ref.shape[-1]
    scale = coef_ref[0:1, :]      # (1, Wc)
    pos_off = coef_ref[1:2, :]    # (1, Wc)

    r0 = pl.program_id(0) * rows
    # Base position of each output row (integer, exact), then exact f32 position
    # per lane: (base + pos_off) is an exact integer sum, so emb matches the
    # reference outer(t, inv_freq) to one rounding (bit-identical for t < 2^24).
    base = ((jax.lax.broadcasted_iota(jnp.int32, (rows, wc), 0) + r0)
            * pos_per_row).astype(jnp.float32)
    emb = (base + pos_off) * scale

    c = jnp.cos(emb).astype(cos_ref.dtype)
    s = jnp.sin(emb).astype(sin_ref.dtype)

    if duplicate_halves:
        # emb_full = cat((freqs, freqs), -1): two lane-aligned stores of the same
        # half-width result (Wc % 128 == 0 on this path, so both are unmasked).
        cos_ref[:, :wc] = c
        cos_ref[:, wc:] = c
        sin_ref[:, :wc] = s
        sin_ref[:, wc:] = s
    else:
        cos_ref[...] = c
        sin_ref[...] = s


def phi_mini_rotary_embedding(x, seq_len, dim, base=10000.0, tile_rows=None):
    """Returns (cos_cached[:, :, :seq_len, :], sin_cached[:, :, :seq_len, :]).

    x is only consulted for dtype (exactly like the PyTorch module).
    `tile_rows` optionally overrides the number of output-table rows per grid step.
    """
    assert dim % 2 == 0, "RoPE dim must be even"
    out_dtype = x.dtype
    half = dim // 2

    # ---- host-side parameter setup (mirrors __init__ / _set_cos_sin_cache glue) ----
    inv_half = 1.0 / (base ** (jnp.arange(0, dim, 2, dtype=jnp.float32) / dim))   # (half,)
    inv_full = jnp.concatenate([inv_half, inv_half])                              # (dim,)

    # ---- pick a static layout config ----
    if dim % 256 == 0:
        # Half-dim transcendental path: compute cos/sin on (rows, dim/2) lane-dense
        # slabs and duplicate into both halves of the output.
        k = 1
        wc = half
        w_out = dim
        duplicate = True
        scale = inv_half
        pos_in_row = jnp.zeros_like(inv_half)
    else:
        if dim % 128 == 0:
            k = 1                                   # already lane-dense, no fold needed
        else:
            k = 128 // math.gcd(dim, 128)           # fold k positions -> k*dim % 128 == 0
            if seq_len % k != 0:
                k = 1                               # fallback: unfolded (masked stores, still correct)
        wc = k * dim
        w_out = wc
        duplicate = False
        scale = jnp.tile(inv_full, k)                                           # (k*dim,)
        pos_in_row = jnp.repeat(jnp.arange(k, dtype=jnp.float32), dim)          # (k*dim,)

    coef = jnp.stack([scale, pos_in_row], axis=0)   # (2, wc) f32

    rows_total = seq_len // k                        # rows of the 2-D output table

    # ---- tile-size selection: bounded, sublane-aligned row tiles ----
    itemsize = int(jnp.dtype(out_dtype).itemsize)
    row_align = max(8, 32 // max(itemsize, 1))       # 8 (f32) / 16 (bf16) / 32 (int8)
    if tile_rows is None:
        tile_rows = max(row_align, (1 << 20) // max(1, w_out * itemsize))  # ~1 MiB / output tile
    tile_r = min(int(tile_rows), rows_total)
    if tile_r < rows_total:
        tile_r = max(row_align, (tile_r // row_align) * row_align)
        tile_r = min(tile_r, rows_total)
    grid = (pl.cdiv(rows_total, tile_r),)

    n_compute = rows_total * wc                      # emb elements actually computed
    cost = pl.CostEstimate(
        flops=3 * n_compute,
        transcendentals=2 * n_compute,
        bytes_accessed=2 * seq_len * dim * itemsize + 2 * wc * 4,
    )

    kernel = functools.partial(
        _rope_cache_kernel, pos_per_row=k, duplicate_halves=duplicate)

    cos_tbl, sin_tbl = pl.pallas_call(
        kernel,
        out_shape=(
            jax.ShapeDtypeStruct((rows_total, w_out), out_dtype),
            jax.ShapeDtypeStruct((rows_total, w_out), out_dtype),
        ),
        grid=grid,
        in_specs=[pl.BlockSpec((2, wc), lambda i: (0, 0))],
        out_specs=(
            pl.BlockSpec((tile_r, w_out), lambda i: (i, 0)),
            pl.BlockSpec((tile_r, w_out), lambda i: (i, 0)),
        ),
        compiler_params=pltpu.CompilerParams(dimension_semantics=("parallel",)),
        cost_estimate=cost,
    )(coef)

    # Folded (rows_total, k*dim) -> (seq_len, dim) is a pure row-major metadata
    # reshape (no data movement); [None, None] matches the PyTorch (1,1,S,D) buffers.
    cos2d = cos_tbl.reshape(seq_len, dim)
    sin2d = sin_tbl.reshape(seq_len, dim)
    return cos2d[None, None, :, :], sin2d[None, None, :, :]


def _reference(x, seq_len, dim, base=10000.0):
    inv_freq = 1.0 / (base ** (jnp.arange(0, dim, 2, dtype=jnp.float32) / dim))
    t = jnp.arange(seq_len, dtype=jnp.float32)
    freqs = jnp.einsum("i,j->ij", t, inv_freq)
    emb = jnp.concatenate([freqs, freqs], axis=-1)
    cos = jnp.cos(emb)[None, None, :, :].astype(x.dtype)
    sin = jnp.sin(emb)[None, None, :, :].astype(x.dtype)
    return cos, sin


if __name__ == "__main__":
    key = jax.random.PRNGKey(0)

    # ---- primary config: small Phi-like shapes, f32, dim < 128 (folded lane-dense path) ----
    batch, num_heads, seq_len, head_dim = 2, 4, 8, 32
    x = jax.random.normal(key, (batch, num_heads, seq_len, head_dim), dtype=jnp.float32)

    cos, sin = phi_mini_rotary_embedding(x, seq_len=seq_len, dim=head_dim, base=10000.0)
    cos, sin = jax.block_until_ready((cos, sin))

    cos_ref, sin_ref = _reference(x, seq_len, head_dim)
    assert cos.shape == (1, 1, seq_len, head_dim) and sin.shape == (1, 1, seq_len, head_dim)
    assert cos.dtype == x.dtype and sin.dtype == x.dtype
    assert jnp.allclose(cos, cos_ref, atol=1e-5, rtol=1e-5)
    assert jnp.allclose(sin, sin_ref, atol=1e-5, rtol=1e-5)

    # ---- secondary config: dim % 256 == 0 (half-dim EUP path), bf16 output ----
    x2 = jax.random.normal(key, (1, 2, 16, 256), dtype=jnp.bfloat16)
    cos2, sin2 = phi_mini_rotary_embedding(x2, seq_len=16, dim=256, base=10000.0)
    cos2, sin2 = jax.block_until_ready((cos2, sin2))
    cr2, sr2 = _reference(x2, 16, 256)
    assert cos2.shape == (1, 1, 16, 256) and cos2.dtype == jnp.bfloat16
    assert jnp.allclose(cos2.astype(jnp.float32), cr2.astype(jnp.float32), atol=1e-2)
    assert jnp.allclose(sin2.astype(jnp.float32), sr2.astype(jnp.float32), atol=1e-2)

    print("KERNEL_OK")
</pallas_src>

<mosaic_0001>
module attributes {stable_mosaic.version = 11 : i64} {
  func.func @_rope_cache_kernel(%arg0: i32, %arg1: memref<2x128xf32, #tpu.memory_space<vmem>>, %arg2: memref<2x128xf32, #tpu.memory_space<vmem>>, %arg3: memref<2x128xf32, #tpu.memory_space<vmem>>) attributes {dimension_semantics = [#tpu.dimension_semantics<parallel>], iteration_bounds = array<i64: 1>, scalar_prefetch = 0 : i64, scratch_operands = 0 : i64, tpu.core_type = #tpu.core_type<tc>, window_params = [{pipeline_mode = #tpu.pipeline_mode<synchronous>, transform_indices = @transform_0, window_bounds = array<i64: 2, 128>}, {transform_indices = @transform_1, window_bounds = array<i64: 2, 128>}, {transform_indices = @transform_2, window_bounds = array<i64: 2, 128>}]} {
    %c0 = arith.constant 0 : index
    %c0_0 = arith.constant 0 : index
    %0 = vector.load %arg1[%c0, %c0_0] : memref<2x128xf32, #tpu.memory_space<vmem>>, vector<1x128xf32>
    %c1 = arith.constant 1 : index
    %c0_1 = arith.constant 0 : index
    %1 = vector.load %arg1[%c1, %c0_1] : memref<2x128xf32, #tpu.memory_space<vmem>>, vector<1x128xf32>
    %c2_i32 = arith.constant 2 : i32
    %2 = arith.muli %arg0, %c2_i32 : i32
    %3 = tpu.iota {dimensions = array<i32: 0>} : vector<2x128xi32>
    %4 = vector.broadcast %2 : i32 to vector<2x128xi32>
    %5 = arith.addi %3, %4 : vector<2x128xi32>
    %c4_i32 = arith.constant 4 : i32
    %6 = vector.broadcast %c4_i32 : i32 to vector<2x128xi32>
    %7 = arith.muli %5, %6 : vector<2x128xi32>
    %8 = arith.sitofp %7 : vector<2x128xi32> to vector<2x128xf32>
    %9 = vector.broadcast %1 : vector<1x128xf32> to vector<2x128xf32>
    %10 = arith.addf %8, %9 : vector<2x128xf32>
    %11 = vector.broadcast %0 : vector<1x128xf32> to vector<2x128xf32>
    %12 = arith.mulf %10, %11 : vector<2x128xf32>
    %13 = math.cos %12 : vector<2x128xf32>
    %14 = math.sin %12 : vector<2x128xf32>
    %c0_2 = arith.constant 0 : index
    %c0_3 = arith.constant 0 : index
    %15 = vector.load %arg2[%c0_2, %c0_3] : memref<2x128xf32, #tpu.memory_space<vmem>>, vector<2x128xf32>
    tpu.vector_store %arg2[%c0_2, %c0_3], %13 {strides = array<i32>} : memref<2x128xf32, #tpu.memory_space<vmem>>, vector<2x128xf32>,
    %c0_4 = arith.constant 0 : index
    %c0_5 = arith.constant 0 : index
    %16 = vector.load %arg3[%c0_4, %c0_5] : memref<2x128xf32, #tpu.memory_space<vmem>>, vector<2x128xf32>
    tpu.vector_store %arg3[%c0_4, %c0_5], %14 {strides = array<i32>} : memref<2x128xf32, #tpu.memory_space<vmem>>, vector<2x128xf32>,
    return
  }
  func.func @transform_0(%arg0: i32) -> (i32, i32) {
    %c0_i32 = arith.constant 0 : i32
    %c0_i32_0 = arith.constant 0 : i32
    %c0_i32_1 = arith.constant 0 : i32
    return %c0_i32, %c0_i32_0 : i32, i32
  }
  func.func @transform_1(%arg0: i32) -> (i32, i32) {
    %c0_i32 = arith.constant 0 : i32
    %c0_i32_0 = arith.constant 0 : i32
    return %arg0, %c0_i32 : i32, i32
  }
  func.func @transform_2(%arg0: i32) -> (i32, i32) {
    %c0_i32 = arith.constant 0 : i32
    %c0_i32_0 = arith.constant 0 : i32
    return %arg0, %c0_i32 : i32, i32
  }
}

</mosaic_0001>

<llo_original>
// kernel: tpu_custom_call.1
$region0: #{tpu_custom_call.1}
  #allocation0 [shape = 'u32[]', space=smem, size = 0x4, offset = 0x4, fixed_abs, tag = 'smem constant byte address 0x4 - core index']
  #allocation1 [shape = 'u32[72,128]{1,0:T(1,128)}', space=vmem, size = 0x9000, scoped, tag = 'internal scratch']
  %s0 = inlined_call_operand.hbm [shape: f32[2,128], index: 0, kind: input, shape index: {}]
  %s1 = inlined_call_operand.hbm [shape: f32[2,128], index: 1, kind: output, shape index: {0}]
  %s2 = inlined_call_operand.hbm [shape: f32[2,128], index: 2, kind: output, shape index: {1}]
  %3 = xla_tuple %s1, %s2
  %s4 = sld [smem:[#allocation0]]
  $region26: #{tpu_custom_call.1} parent=0
    _
  %s6 = ssub.s32 1, %s4
  %s7 = scalar_select 0, %s6, %s4
  $region1: #{tpu_custom_call.1} parent=0
    #allocation2 [shape = 'u8[1024]{0}', space=vmem, size = 0x400, scoped, tag = 'input window, operand 0, single buffered']
    #allocation3 [shape = 's32[1]{0}', space=sflag, size = 0x4, scoped, tag = 'scoped memory for tpu_custom_call.1']
    #allocation4 [shape = 's32[1]{0}', space=sflag, size = 0x4, scoped, tag = 'scoped memory for tpu_custom_call.1']
    #allocation5 [shape = 'u8[1024]{0}', space=vmem, size = 0x400, scoped, tag = 'output window, operand 0, single buffered']
    #allocation6 [shape = 'u8[1024]{0}', space=vmem, size = 0x400, scoped, tag = 'output window, operand 1, single buffered']
    #allocation7 [shape = 's32[1]{0}', space=sflag, size = 0x4, scoped, tag = 'scoped memory for tpu_custom_call.1']
    %8 = vsyncpa [#allocation3], 0
    %9 = vsyncpa [#allocation4], 0
    %10 = vsyncpa [#allocation7], 0
    // Predicated region
    $region2: #{tpu_custom_call.1} parent=1 // pred_check
      _
    $region3: #{tpu_custom_call.1} parent=1 // pred_check_branch
      %12 = sbr.rel (0) target = $region5
    $region4: #{tpu_custom_call.1} parent=1 // pred_region
      %14 = vsyncadd [#allocation3], 0
      %s16 = sshll.u32 %s0, 4
      %s17 = int_to_ptr.hbm [resolvable:$true] %s16
      %s18 = sshll.u32 [#allocation2], 4
      %s19 = int_to_ptr.vmem [resolvable:$true] %s18
      %21 = dma.hbm_to_vmem [thread:$0]  %s17, 32, %s19, [#allocation3]
    $region5: #{tpu_custom_call.1} parent=1 // pred_fallthru
      _
    // Predicated region
    $region6: #{tpu_custom_call.1} parent=1 // pred_check
      _
    $region7: #{tpu_custom_call.1} parent=1 // pred_check_branch
      %23 = sbr.rel (0) target = $region9
    $region8: #{tpu_custom_call.1} parent=1 // pred_region
      %25 = dma.done [#allocation3], 32
    $region9: #{tpu_custom_call.1} parent=1 // pred_fallthru
      _
    %v26 = vld [vmem:[#allocation2] sm:$0x1]
    %v27 = vld [vmem:[#allocation2 + $0x1] sm:$0x1]
    %s28 = smul.u32 0, 2
    %v29 = vlaneseq
    %v30 = vshrl.u32 %v29, 7
    %v31 = vstv %s28
    %v32 = vadd.s32 %v30, %v31
    %v33 = vmul.u32 %v32, 4
    %v34 = vcvt.s32.f32 %v33
    %v35 = vperm.slane %v27, 0
    %v36 = vadd.f32 %v34, %v35
    %v37 = vperm.slane %v26, 0
    %v38 = vmul.f32 %v36, %v37
    %v39 = vand.u32 2147483647, %v38
    %vm40 = vcmp.le.f32.partialorder %v39, 0.7853982
    %vm41 = vcmp.lt.s32.totalorder %v38, 0
    %v42 = vand.u32 %v38, 2139095040
    %v43 = vshrl.u32 %v42, 23
    %v44 = vsub.s32 %v43, 127
    %v45 = vand.u32 2147483647, %v38
    %v46 = vand.u32 %v45, 8388607
    %v47 = vor.u32 %v46, 8388608
    %v48 = vsub.s32 0, %v47
    %v49 = vadd.s32 %v44, 1
    %vm50 = vcmp.gt.s32.totalorder %v49, 0
    %v51 = vsel %vm50, %v49, 0
    %v52 = vshrl.u32 %v51, 5
    %v53 = vand.u32 %v51, 31
    %v54 = vsub.s32 32, %v53
    %v55 = vshrl.u32 683565275, %v54
    %v56 = vshll.u32 683565275, %v53
    %v57 = vshrl.u32 2475754826, %v54
    %v58 = vor.u32 %v56, %v57
    %v59 = vshll.u32 2475754826, %v53
    %v60 = vshrl.u32 2131351028, %v54
    %v61 = vor.u32 %v59, %v60
    %v62 = vshll.u32 2131351028, %v53
    %v63 = vshrl.u32 2102212464, %v54
    %v64 = vor.u32 %v62, %v63
    %v65 = vshll.u32 2102212464, %v53
    %v66 = vshrl.u32 920167782, %v54
    %v67 = vor.u32 %v65, %v66
    %v68 = vshll.u32 920167782, %v53
    %v69 = vshrl.u32 1326507024, %v54
    %v70 = vor.u32 %v68, %v69
    %vm71 = vcmp.lt.s32.totalorder %v52, 1
    %vm72 = vcmp.lt.s32.totalorder %v52, 2
    %vm73 = vcmp.lt.s32.totalorder %v52, 3
    %vm74 = vcmp.lt.s32.totalorder %v52, 4
    %v75 = vsel %vm71, %v55, %v58
    %v76 = vsel %vm74, %v64, 2102212464
    %v77 = vsel %vm73, %v61, %v76
    %v78 = vsel %vm72, %v75, %v77
    %v79 = vsel %vm71, %v58, %v61
    %v80 = vsel %vm74, %v67, 920167782
    %v81 = vsel %vm73, %v64, %v80
    %v82 = vsel %vm72, %v79, %v81
    %v83 = vsel %vm71, %v61, %v64
    %v84 = vsel %vm74, %v70, 1326507024
    %v85 = vsel %vm73, %v67, %v84
    %v86 = vsel %vm72, %v83, %v85
    %v87 = vshll.u32 %v47, 8
    %v88 = vand.u32 %v87, 65535
    %v89 = vshrl.u32 %v87, 16
    %v90 = vand.u32 %v86, 65535
    %v91 = vshrl.u32 %v86, 16
    %v92 = vmul.u32 %v88, %v90
    %v93 = vmul.u32 %v88, %v91
    %v94 = vmul.u32 %v89, %v90
    %v95 = vmul.u32 %v89, %v91
    %v96 = vshll.u32 %v93, 16
    %v97 = vshrl.u32 %v93, 16
    %v98 = vshll.u32 %v94, 16
    %v99 = vshrl.u32 %v94, 16
    %vm100 = vc.u32 %v92, %v96
    %v101 = vsel %vm100, 1, 0
    %v102 = vadd.s32 %v92, %v96
    %v103 = vadd.s32 %v95, %v101
    %vm104 = vc.u32 %v102, %v98
    %v105 = vsel %vm104, 1, 0
    %v106 = vadd.s32 %v102, %v98
    %v107 = vadd.s32 %v103, %v105
    %v108 = vadd.s32 %v107, %v97
    %v109 = vadd.s32 %v108, %v99
    %v110 = vand.u32 %v87, 65535
    %v111 = vshrl.u32 %v87, 16
    %v112 = vand.u32 %v82, 65535
    %v113 = vshrl.u32 %v82, 16
    %v114 = vmul.u32 %v110, %v112
    %v115 = vmul.u32 %v110, %v113
    %v116 = vmul.u32 %v111, %v112
    %v117 = vmul.u32 %v111, %v113
    %v118 = vshll.u32 %v115, 16
    %v119 = vshrl.u32 %v115, 16
    %v120 = vshll.u32 %v116, 16
    %v121 = vshrl.u32 %v116, 16
    %vm122 = vc.u32 %v114, %v118
    %v123 = vsel %vm122, 1, 0
    %v124 = vadd.s32 %v114, %v118
    %v125 = vadd.s32 %v117, %v123
    %vm126 = vc.u32 %v124, %v120
    %v127 = vsel %vm126, 1, 0
    %v128 = vadd.s32 %v124, %v120
    %v129 = vadd.s32 %v125, %v127
    %v130 = vadd.s32 %v129, %v119
    %v131 = vadd.s32 %v130, %v121
    %v132 = vmul.u32 %v87, %v78
    %v133 = vadd.s32 %v109, %v128
    %vm134 = vc.u32 %v109, %v128
    %v135 = vadd.s32 %v131, 1
    %v136 = vsel %vm134, %v135, %v131
    %v137 = vadd.s32 %v132, %v136
    %v138 = vadd.s32 %v137, 536870912
    %v139 = vshrl.u32 %v138, 30
    %v140 = vshll.u32 %v139, 30
    %v141 = vsub.s32 %v137, %v140
    %vm142 = vcmp.lt.s32.totalorder %v141, 0
    %v143 = vsub.s32 0, %v141
    %v144 = vsel %vm142, %v143, %v141
    %v145 = vclz %v144
    %v146 = vsub.s32 %v145, 2
    %vm147 = vcmp.gt.s32.totalorder 0, %v146
    %v148 = vsel %vm147, 0, %v146
    %v149 = vsub.s32 32, %v148
    %v150 = vshll.u32 %v141, %v148
    %v151 = vshrl.u32 %v133, %v149
    %v152 = vor.u32 %v150, %v151
    %v153 = vsub.s32 4294967266, %v148
    %v154 = vadd.s32 %v153, 127
    %v155 = vshll.u32 %v154, 23
    %v156 = vor.u32 4788187, %v155
    %v157 = vand.u32 2147483647, %v156
    %v159 = vcvt.s32.f32 %v152
    %v160 = vmul.f32 %v159, %v157
    %v161 = vxor.u32 %v160, 2147483648
    %v162 = vsel %vm41, %v161, %v160
    %v163 = vsub.s32 4, %v139
    %v164 = vsel %vm41, %v163, %v139
    %v165 = vsel %vm40, %v38, %v162
    %v166 = vsel %vm40, 0, %v164
    %v167 = vmul.f32 %v165, %v165
    %v168 = vmul.f32 %v167, -0.001358992
    %v169 = vadd.f32 %v168, 0.041655596
    %v170 = vmul.f32 %v167, %v169
    %v171 = vadd.f32 %v170, -0.4999988
    %v172 = vmul.f32 %v167, %v171
    %v173 = vadd.f32 1.0, %v172
    %v174 = vmul.f32 %v165, %v165
    %v175 = vmul.f32 %v174, -0.00019511016
    %v176 = vadd.f32 %v175, 0.008332121
    %v177 = vmul.f32 %v174, %v176
    %v178 = vadd.f32 %v177, -0.16666654
    %v179 = vmul.f32 %v174, %v178
    %v180 = vadd.f32 %v179, 1.0
    %v181 = vmul.f32 %v180, %v165
    %vm182 = vweird.f32 %v38
    %v183 = vand.u32 %v166, 3
    %vm184 = vcmp.lt.s32.totalorder %v183, 2
    %vm185 = vcmp.eq.s32.totalorder %v183, 0
    %v186 = vxor.u32 %v181, 2147483648
    %v187 = vsel %vm185, %v173, %v186
    %vm188 = vcmp.eq.s32.totalorder %v183, 2
    %v189 = vxor.u32 %v173, 2147483648
    %v190 = vsel %vm188, %v189, %v181
    %v191 = vsel %vm184, %v187, %v190
    %v192 = vsel %vm182, nan, %v191
    %v193 = vand.u32 2147483647, %v38
    %vm194 = vcmp.le.f32.partialorder %v193, 0.7853982
    %vm195 = vcmp.lt.s32.totalorder %v38, 0
    %v196 = vand.u32 %v38, 2139095040
    %v197 = vshrl.u32 %v196, 23
    %v198 = vsub.s32 %v197, 127
    %v199 = vand.u32 2147483647, %v38
    %v200 = vand.u32 %v199, 8388607
    %v201 = vor.u32 %v200, 8388608
    %v202 = vsub.s32 0, %v201
    %v203 = vadd.s32 %v198, 1
    %vm204 = vcmp.gt.s32.totalorder %v203, 0
    %v205 = vsel %vm204, %v203, 0
    %v206 = vshrl.u32 %v205, 5
    %v207 = vand.u32 %v205, 31
    %v208 = vsub.s32 32, %v207
    %v209 = vshrl.u32 683565275, %v208
    %v210 = vshll.u32 683565275, %v207
    %v211 = vshrl.u32 2475754826, %v208
    %v212 = vor.u32 %v210, %v211
    %v213 = vshll.u32 2475754826, %v207
    %v214 = vshrl.u32 2131351028, %v208
    %v215 = vor.u32 %v213, %v214
    %v216 = vshll.u32 2131351028, %v207
    %v217 = vshrl.u32 2102212464, %v208
    %v218 = vor.u32 %v216, %v217
    %v219 = vshll.u32 2102212464, %v207
    %v220 = vshrl.u32 920167782, %v208
    %v221 = vor.u32 %v219, %v220
    %v222 = vshll.u32 920167782, %v207
    %v223 = vshrl.u32 1326507024, %v208
    %v224 = vor.u32 %v222, %v223
    %vm225 = vcmp.lt.s32.totalorder %v206, 1
    %vm226 = vcmp.lt.s32.totalorder %v206, 2
    %vm227 = vcmp.lt.s32.totalorder %v206, 3
    %vm228 = vcmp.lt.s32.totalorder %v206, 4
    %v229 = vsel %vm225, %v209, %v212
    %v230 = vsel %vm228, %v218, 2102212464
    %v231 = vsel %vm227, %v215, %v230
    %v232 = vsel %vm226, %v229, %v231
    %v233 = vsel %vm225, %v212, %v215
    %v234 = vsel %vm228, %v221, 920167782
    %v235 = vsel %vm227, %v218, %v234
    %v236 = vsel %vm226, %v233, %v235
    %v237 = vsel %vm225, %v215, %v218
    %v238 = vsel %vm228, %v224, 1326507024
    %v239 = vsel %vm227, %v221, %v238
    %v240 = vsel %vm226, %v237, %v239
    %v241 = vshll.u32 %v201, 8
    %v242 = vand.u32 %v241, 65535
    %v243 = vshrl.u32 %v241, 16
    %v244 = vand.u32 %v240, 65535
    %v245 = vshrl.u32 %v240, 16
    %v246 = vmul.u32 %v242, %v244
    %v247 = vmul.u32 %v242, %v245
    %v248 = vmul.u32 %v243, %v244
    %v249 = vmul.u32 %v243, %v245
    %v250 = vshll.u32 %v247, 16
    %v251 = vshrl.u32 %v247, 16
    %v252 = vshll.u32 %v248, 16
    %v253 = vshrl.u32 %v248, 16
    %vm254 = vc.u32 %v246, %v250
    %v255 = vsel %vm254, 1, 0
    %v256 = vadd.s32 %v246, %v250
    %v257 = vadd.s32 %v249, %v255
    %vm258 = vc.u32 %v256, %v252
    %v259 = vsel %vm258, 1, 0
    %v260 = vadd.s32 %v256, %v252
    %v261 = vadd.s32 %v257, %v259
    %v262 = vadd.s32 %v261, %v251
    %v263 = vadd.s32 %v262, %v253
    %v264 = vand.u32 %v241, 65535
    %v265 = vshrl.u32 %v241, 16
    %v266 = vand.u32 %v236, 65535
    %v267 = vshrl.u32 %v236, 16
    %v268 = vmul.u32 %v264, %v266
    %v269 = vmul.u32 %v264, %v267
    %v270 = vmul.u32 %v265, %v266
    %v271 = vmul.u32 %v265, %v267
    %v272 = vshll.u32 %v269, 16
    %v273 = vshrl.u32 %v269, 16
    %v274 = vshll.u32 %v270, 16
    %v275 = vshrl.u32 %v270, 16
    %vm276 = vc.u32 %v268, %v272
    %v277 = vsel %vm276, 1, 0
    %v278 = vadd.s32 %v268, %v272
    %v279 = vadd.s32 %v271, %v277
    %vm280 = vc.u32 %v278, %v274
    %v281 = vsel %vm280, 1, 0
    %v282 = vadd.s32 %v278, %v274
    %v283 = vadd.s32 %v279, %v281
    %v284 = vadd.s32 %v283, %v273
    %v285 = vadd.s32 %v284, %v275
    %v286 = vmul.u32 %v241, %v232
    %v287 = vadd.s32 %v263, %v282
    %vm288 = vc.u32 %v263, %v282
    %v289 = vadd.s32 %v285, 1
    %v290 = vsel %vm288, %v289, %v285
    %v291 = vadd.s32 %v286, %v290
    %v292 = vadd.s32 %v291, 536870912
    %v293 = vshrl.u32 %v292, 30
    %v294 = vshll.u32 %v293, 30
    %v295 = vsub.s32 %v291, %v294
    %vm296 = vcmp.lt.s32.totalorder %v295, 0
    %v297 = vsub.s32 0, %v295
    %v298 = vsel %vm296, %v297, %v295
    %v299 = vclz %v298
    %v300 = vsub.s32 %v299, 2
    %vm301 = vcmp.gt.s32.totalorder 0, %v300
    %v302 = vsel %vm301, 0, %v300
    %v303 = vsub.s32 32, %v302
    %v304 = vshll.u32 %v295, %v302
    %v305 = vshrl.u32 %v287, %v303
    %v306 = vor.u32 %v304, %v305
    %v307 = vsub.s32 4294967266, %v302
    %v308 = vadd.s32 %v307, 127
    %v309 = vshll.u32 %v308, 23
    %v310 = vor.u32 4788187, %v309
    %v311 = vand.u32 2147483647, %v310
    %v313 = vcvt.s32.f32 %v306
    %v314 = vmul.f32 %v313, %v311
    %v315 = vxor.u32 %v314, 2147483648
    %v316 = vsel %vm195, %v315, %v314
    %v317 = vsub.s32 4, %v293
    %v318 = vsel %vm195, %v317, %v293
    %v319 = vsel %vm194, %v38, %v316
    %v320 = vsel %vm194, 0, %v318
    %v321 = vmul.f32 %v319, %v319
    %v322 = vmul.f32 %v321, -0.001358992
    %v323 = vadd.f32 %v322, 0.041655596
    %v324 = vmul.f32 %v321, %v323
    %v325 = vadd.f32 %v324, -0.4999988
    %v326 = vmul.f32 %v321, %v325
    %v327 = vadd.f32 1.0, %v326
    %v328 = vmul.f32 %v319, %v319
    %v329 = vmul.f32 %v328, -0.00019511016
    %v330 = vadd.f32 %v329, 0.008332121
    %v331 = vmul.f32 %v328, %v330
    %v332 = vadd.f32 %v331, -0.16666654
    %v333 = vmul.f32 %v328, %v332
    %v334 = vadd.f32 %v333, 1.0
    %v335 = vmul.f32 %v334, %v319
    %vm336 = vweird.f32 %v38
    %v337 = vadd.s32 %v320, 3
    %v338 = vand.u32 %v337, 3
    %vm339 = vcmp.lt.s32.totalorder %v338, 2
    %vm340 = vcmp.eq.s32.totalorder %v338, 0
    %v341 = vxor.u32 %v335, 2147483648
    %v342 = vsel %vm340, %v327, %v341
    %vm343 = vcmp.eq.s32.totalorder %v338, 2
    %v344 = vxor.u32 %v327, 2147483648
    %v345 = vsel %vm343, %v344, %v335
    %v346 = vsel %vm339, %v342, %v345
    %v347 = vsel %vm336, nan, %v346
    %348 = vst [vmem:[#allocation5] sm:$0x3] %v192
    %349 = vst [vmem:[#allocation6] sm:$0x3] %v347
    // Predicated region
    $region10: #{tpu_custom_call.1} parent=1 // pred_check
      _
    $region11: #{tpu_custom_call.1} parent=1 // pred_check_branch
      %351 = sbr.rel (0) target = $region13
    $region12: #{tpu_custom_call.1} parent=1 // pred_region
      %353 = vsyncadd [#allocation4], 0
      %s355 = sshll.u32 [#allocation5], 4
      %s356 = int_to_ptr.vmem [resolvable:$true] %s355
      %s357 = sshll.u32 %s1, 4
      %s358 = int_to_ptr.hbm [resolvable:$true] %s357
      %360 = dma.vmem_to_hbm [thread:$0]  %s356, 32, %s358, [#allocation4]
    $region13: #{tpu_custom_call.1} parent=1 // pred_fallthru
      _
    // Predicated region
    $region14: #{tpu_custom_call.1} parent=1 // pred_check
      _
    $region15: #{tpu_custom_call.1} parent=1 // pred_check_branch
      %362 = sbr.rel (0) target = $region17
    $region16: #{tpu_custom_call.1} parent=1 // pred_region
      %364 = vsyncadd [#allocation7], 0
      %s366 = sshll.u32 [#allocation6], 4
      %s367 = int_to_ptr.vmem [resolvable:$true] %s366
      %s368 = sshll.u32 %s2, 4
      %s369 = int_to_ptr.hbm [resolvable:$true] %s368
      %371 = dma.vmem_to_hbm [thread:$0]  %s367, 32, %s369, [#allocation7]
    $region17: #{tpu_custom_call.1} parent=1 // pred_fallthru
      _
    // Predicated region
    $region18: #{tpu_custom_call.1} parent=1 // pred_check
      _
    $region19: #{tpu_custom_call.1} parent=1 // pred_check_branch
      %373 = sbr.rel (0) target = $region21
    $region20: #{tpu_custom_call.1} parent=1 // pred_region
      %375 = dma.done [#allocation4], 32
    $region21: #{tpu_custom_call.1} parent=1 // pred_fallthru
      _
    // Predicated region
    $region22: #{tpu_custom_call.1} parent=1 // pred_check
      _
    $region23: #{tpu_custom_call.1} parent=1 // pred_check_branch
      %377 = sbr.rel (0) target = $region25
    $region24: #{tpu_custom_call.1} parent=1 // pred_region
      %379 = dma.done [#allocation7], 32
    $region25: #{tpu_custom_call.1} parent=1 // pred_fallthru
      _
    %380 = vsyncpa [#allocation3], 1
    %381 = vsyncpa [#allocation4], 1
    %382 = vsyncpa [#allocation7], 1

</llo_original>
